<compile_context>
chip_gen: v5e
topology: v5e:2x2
jax: 0.10.0
libtpu: 0.0.40
codegen_flags: <defaults>
</compile_context>

<pallas_src>
import math

import jax
import jax.numpy as jnp
from jax import lax
from jax.experimental import pallas as pl
from jax.experimental.pallas import tpu as pltpu


# ---------------------------------------------------------------------------
# helpers
# ---------------------------------------------------------------------------
def _round_up(x, m):
    return ((x + m - 1) // m) * m


def _apply_act(name, h):
    if name == "tanh":
        return jnp.tanh(h)
    if name == "relu":
        return jnp.maximum(h, 0.0)
    if name in ("none", "identity"):
        return h
    raise ValueError(f"unsupported activation: {name}")


# ---------------------------------------------------------------------------
# fused Pallas kernel: whole MLP on one batch tile, feature-major activations
# ---------------------------------------------------------------------------
def _make_fused_mlp_kernel(n_layers, hidden_act, last_act, matmul_dtype):
    def kernel(*refs):
        x_ref = refs[0]            # (tm, K)   row-major batch tile
        o_ref = refs[-1]           # (cp, tm)  feature-major output tile
        wb_refs = refs[1:-1]       # [w0, b0, w1, b1, ...] resident in VMEM

        x = x_ref[...]
        if matmul_dtype is not None:
            x = x.astype(matmul_dtype)

        h = None
        for li in range(n_layers):
            w = wb_refs[2 * li][...]          # (out_p, in)
            b = wb_refs[2 * li + 1][...]      # (out_p, 1) -> lane broadcast
            if matmul_dtype is not None:
                w = w.astype(matmul_dtype)
            if li == 0:
                # (out_p, K) x (tm, K) contracted on K -> (out_p, tm): result
                # is already feature-major with no wrapper-side transpose of x.
                h = lax.dot_general(w, x, (((1,), (1,)), ((), ())),
                                    preferred_element_type=jnp.float32)
            else:
                hc = h if matmul_dtype is None else h.astype(matmul_dtype)
                h = jnp.dot(w, hc, preferred_element_type=jnp.float32)
            h = h + b.astype(jnp.float32)
            h = _apply_act(hidden_act if li < n_layers - 1 else last_act, h)
        o_ref[...] = h.astype(o_ref.dtype)

    return kernel


def _pad_params_feature_major(params):
    """Zero-pad every layer's out-features up to a multiple of 8 (sublanes).

    Weights stay in PyTorch (out_features, in_features) orientation; biases
    become (out_features, 1) columns for lane-broadcast inside the kernel.
    """
    padded = []
    prev_out = params[0][0].shape[1]          # input_size, left unpadded
    for w, b in params:
        fo, fi = w.shape
        fop = _round_up(fo, 8)
        wp = jnp.zeros((fop, prev_out), w.dtype).at[:fo, :fi].set(w)
        bp = jnp.zeros((fop, 1), b.dtype).at[:fo, 0].set(b)
        padded.append((wp, bp))
        prev_out = fop
    return padded


# ---------------------------------------------------------------------------
# MLP module (parameters + forward) mirroring the PyTorch class
# ---------------------------------------------------------------------------
def init_mlp_params(key, input_size, hidden_size, num_classes, depth,
                    dtype=jnp.float32):
    """nn.Linear-style init, weights kept in PyTorch (out, in) orientation."""
    sizes = [input_size] + [hidden_size] * (depth - 1) + [num_classes]
    params = []
    for li in range(depth):
        fan_in, fan_out = sizes[li], sizes[li + 1]
        key, kw, kb = jax.random.split(key, 3)
        bound = 1.0 / math.sqrt(fan_in)
        w = jax.random.uniform(kw, (fan_out, fan_in), dtype, -bound, bound)
        b = jax.random.uniform(kb, (fan_out,), dtype, -bound, bound)
        params.append((w, b))
    return params


def mlp_forward(params, x, final_act=False, act="tanh", tm_max=512,
                matmul_dtype=None):
    """Forward pass of the MLP, computed by ONE fused Pallas kernel.

    x: (batch, input_size) row-major (PyTorch layout).
    Returns (batch, num_classes).  `act` applied to every layer but the last;
    the last layer gets ReLU only if final_act=True.
    matmul_dtype: optionally jnp.bfloat16 to feed the MXU bf16 inputs (f32
    accumulation); default None keeps full f32 to satisfy 1e-4 tolerances.
    """
    M, K = x.shape
    n_layers = len(params)
    num_classes = params[-1][0].shape[0]

    padded = _pad_params_feature_major(params)
    cp = padded[-1][0].shape[0]                  # padded num_classes (mult of 8)

    # --- batch (lane) tile selection -------------------------------------
    # Always a multiple of 128, at most tm_max, and >= 2 grid steps whenever
    # the batch allows it (v7x has 2 TensorCores; also lets the BlockSpec
    # pipeline overlap the next x DMA with compute).
    tm_cap = max(128, (int(tm_max) // 128) * 128)
    tm = min(tm_cap, max(128, _round_up(pl.cdiv(M, 2), 128)))

    # --- keep the working set comfortably inside v7x's 64 MiB VMEM -------
    hidden_max_p = max(w.shape[0] for w, _ in padded)
    param_bytes = 2 * sum(4 * (w.size + b.size) for w, b in padded)  # dbl-buf

    def vmem_bytes(t):
        return (2 * 4 * t * K              # x tile, double-buffered
                + 2 * 4 * cp * t           # output tile, double-buffered
                + 2 * 4 * hidden_max_p * t  # live activation / compiler temps
                + param_bytes)

    vmem_budget = 40 * 1024 * 1024
    while tm > 128 and vmem_bytes(tm) > vmem_budget:
        tm -= 128

    n_tiles = pl.cdiv(M, tm)

    flat_params = []
    in_specs = [pl.BlockSpec((tm, K), lambda i: (i, 0))]   # x in native layout
    for w, b in padded:
        flat_params += [w, b]
        # TODO(synk): pipeline_mode=pl.Buffered(1) would single-buffer these
        # constant-index resident params (tiny VMEM saving); kept on the
        # default path for lowering robustness.
        in_specs += [pl.BlockSpec(w.shape, lambda i: (0, 0)),   # resident
                     pl.BlockSpec(b.shape, lambda i: (0, 0))]   # resident

    kernel = _make_fused_mlp_kernel(n_layers, act,
                                    "relu" if final_act else "none",
                                    matmul_dtype)

    # advisory cost estimate for XLA's scheduler
    flops = 2 * M * sum(w.shape[0] * w.shape[1] for w, _ in padded)
    transcendentals = (M * sum(w.shape[0] for w, _ in padded[:-1])
                       if act == "tanh" else 0)
    bytes_io = 4 * (x.size + sum(w.size + b.size for w, b in padded) + cp * M)

    out_t = pl.pallas_call(
        kernel,
        out_shape=jax.ShapeDtypeStruct((cp, M), x.dtype),
        grid_spec=pltpu.PrefetchScalarGridSpec(
            num_scalar_prefetch=0,
            grid=(n_tiles,),
            in_specs=in_specs,
            out_specs=pl.BlockSpec((cp, tm), lambda i: (0, i)),
        ),
        compiler_params=pltpu.CompilerParams(
            dimension_semantics=("parallel",),
            vmem_limit_bytes=int(min(64 << 20,
                                     max(32 << 20, 2 * vmem_bytes(tm)))),
        ),
        cost_estimate=pl.CostEstimate(flops=int(flops),
                                      transcendentals=int(transcendentals),
                                      bytes_accessed=int(bytes_io)),
    )(x, *flat_params)

    # slice first (drop padded feature rows), then the cheap small transpose.
    return jnp.transpose(out_t[:num_classes, :])


# ---------------------------------------------------------------------------
# Reference (pure JAX) for sanity checking
# ---------------------------------------------------------------------------
def mlp_forward_ref(params, x, final_act=False):
    for w, b in params[:-1]:
        x = jnp.tanh(x @ w.T + b)
    w, b = params[-1]
    x = x @ w.T + b
    return jnp.maximum(x, 0.0) if final_act else x


if __name__ == "__main__":
    key = jax.random.PRNGKey(0)

    input_size, hidden_size, num_classes, depth = 16, 32, 4, 4
    batch = 256

    key, kx = jax.random.split(key)
    x = jax.random.normal(kx, (batch, input_size), dtype=jnp.float32)
    params = init_mlp_params(key, input_size, hidden_size, num_classes, depth)

    # fused-kernel forward vs pure-JAX reference (2 grid tiles at batch=256)
    out = jax.block_until_ready(mlp_forward(params, x, final_act=False))
    ref = mlp_forward_ref(params, x, final_act=False)
    assert out.shape == (batch, num_classes)
    assert jnp.allclose(out, ref, atol=1e-4, rtol=1e-4), "mismatch vs reference"

    # final_act=True (ReLU on last layer)
    out_relu = jax.block_until_ready(mlp_forward(params, x, final_act=True))
    ref_relu = mlp_forward_ref(params, x, final_act=True)
    assert jnp.allclose(out_relu, ref_relu, atol=1e-4, rtol=1e-4)

    # ragged batch (not a multiple of 128) exercises the partial-block path
    xb = jax.random.normal(jax.random.PRNGKey(1), (100, input_size),
                           dtype=jnp.float32)
    outb = jax.block_until_ready(mlp_forward(params, xb, final_act=False))
    refb = mlp_forward_ref(params, xb, final_act=False)
    assert outb.shape == (100, num_classes)
    assert jnp.allclose(outb, refb, atol=1e-4, rtol=1e-4)

    # larger batch with several 512-row grid tiles
    xl = jax.random.normal(jax.random.PRNGKey(2), (1536, input_size),
                           dtype=jnp.float32)
    outl = jax.block_until_ready(mlp_forward(params, xl, final_act=False))
    refl = mlp_forward_ref(params, xl, final_act=False)
    assert jnp.allclose(outl, refl, atol=1e-4, rtol=1e-4)

    print("KERNEL_OK")
</pallas_src>

<mosaic_0001>
module attributes {stable_mosaic.version = 11 : i64} {
  func.func @kernel(%arg0: i32, %arg1: memref<128x16xf32, #tpu.memory_space<vmem>>, %arg2: memref<32x16xf32, #tpu.memory_space<vmem>>, %arg3: memref<32x1xf32, #tpu.memory_space<vmem>>, %arg4: memref<32x32xf32, #tpu.memory_space<vmem>>, %arg5: memref<32x1xf32, #tpu.memory_space<vmem>>, %arg6: memref<32x32xf32, #tpu.memory_space<vmem>>, %arg7: memref<32x1xf32, #tpu.memory_space<vmem>>, %arg8: memref<8x32xf32, #tpu.memory_space<vmem>>, %arg9: memref<8x1xf32, #tpu.memory_space<vmem>>, %arg10: memref<8x128xf32, #tpu.memory_space<vmem>>) attributes {dimension_semantics = [#tpu.dimension_semantics<parallel>], iteration_bounds = array<i64: 2>, scalar_prefetch = 0 : i64, scratch_operands = 0 : i64, tpu.core_type = #tpu.core_type<tc>, window_params = [{transform_indices = @transform_0, window_bounds = array<i64: 128, 16>}, {pipeline_mode = #tpu.pipeline_mode<synchronous>, transform_indices = @transform_1, window_bounds = array<i64: 32, 16>}, {pipeline_mode = #tpu.pipeline_mode<synchronous>, transform_indices = @transform_2, window_bounds = array<i64: 32, 1>}, {pipeline_mode = #tpu.pipeline_mode<synchronous>, transform_indices = @transform_3, window_bounds = array<i64: 32, 32>}, {pipeline_mode = #tpu.pipeline_mode<synchronous>, transform_indices = @transform_4, window_bounds = array<i64: 32, 1>}, {pipeline_mode = #tpu.pipeline_mode<synchronous>, transform_indices = @transform_5, window_bounds = array<i64: 32, 32>}, {pipeline_mode = #tpu.pipeline_mode<synchronous>, transform_indices = @transform_6, window_bounds = array<i64: 32, 1>}, {pipeline_mode = #tpu.pipeline_mode<synchronous>, transform_indices = @transform_7, window_bounds = array<i64: 8, 32>}, {pipeline_mode = #tpu.pipeline_mode<synchronous>, transform_indices = @transform_8, window_bounds = array<i64: 8, 1>}, {transform_indices = @transform_9, window_bounds = array<i64: 8, 128>}]} {
    %c0 = arith.constant 0 : index
    %c0_0 = arith.constant 0 : index
    %0 = vector.load %arg1[%c0, %c0_0] : memref<128x16xf32, #tpu.memory_space<vmem>>, vector<128x16xf32>
    %c0_1 = arith.constant 0 : index
    %c0_2 = arith.constant 0 : index
    %1 = vector.load %arg2[%c0_1, %c0_2] : memref<32x16xf32, #tpu.memory_space<vmem>>, vector<32x16xf32>
    %c0_3 = arith.constant 0 : index
    %c0_4 = arith.constant 0 : index
    %2 = vector.load %arg3[%c0_3, %c0_4] : memref<32x1xf32, #tpu.memory_space<vmem>>, vector<32x1xf32>
    %cst = arith.constant dense<0.000000e+00> : vector<32x128xf32>
    %3 = tpu.matmul %1, %0, %cst {dimension_numbers = #tpu.dot_dimension_numbers<[1], [1], [0], [0], [0, 0, 1, 0], [], []>} : vector<32x16xf32>, vector<128x16xf32>, vector<32x128xf32> -> vector<32x128xf32>
    %4 = vector.broadcast %2 : vector<32x1xf32> to vector<32x128xf32>
    %5 = arith.addf %3, %4 : vector<32x128xf32>
    %6 = math.tanh %5 : vector<32x128xf32>
    %c0_5 = arith.constant 0 : index
    %c0_6 = arith.constant 0 : index
    %7 = vector.load %arg4[%c0_5, %c0_6] : memref<32x32xf32, #tpu.memory_space<vmem>>, vector<32x32xf32>
    %c0_7 = arith.constant 0 : index
    %c0_8 = arith.constant 0 : index
    %8 = vector.load %arg5[%c0_7, %c0_8] : memref<32x1xf32, #tpu.memory_space<vmem>>, vector<32x1xf32>
    %cst_9 = arith.constant dense<0.000000e+00> : vector<32x128xf32>
    %9 = tpu.matmul %7, %6, %cst_9 {dimension_numbers = #tpu.dot_dimension_numbers<[1], [0], [0], [1], [0, 0, 1, 1], [], []>} : vector<32x32xf32>, vector<32x128xf32>, vector<32x128xf32> -> vector<32x128xf32>
    %10 = vector.broadcast %8 : vector<32x1xf32> to vector<32x128xf32>
    %11 = arith.addf %9, %10 : vector<32x128xf32>
    %12 = math.tanh %11 : vector<32x128xf32>
    %c0_10 = arith.constant 0 : index
    %c0_11 = arith.constant 0 : index
    %13 = vector.load %arg6[%c0_10, %c0_11] : memref<32x32xf32, #tpu.memory_space<vmem>>, vector<32x32xf32>
    %c0_12 = arith.constant 0 : index
    %c0_13 = arith.constant 0 : index
    %14 = vector.load %arg7[%c0_12, %c0_13] : memref<32x1xf32, #tpu.memory_space<vmem>>, vector<32x1xf32>
    %cst_14 = arith.constant dense<0.000000e+00> : vector<32x128xf32>
    %15 = tpu.matmul %13, %12, %cst_14 {dimension_numbers = #tpu.dot_dimension_numbers<[1], [0], [0], [1], [0, 0, 1, 1], [], []>} : vector<32x32xf32>, vector<32x128xf32>, vector<32x128xf32> -> vector<32x128xf32>
    %16 = vector.broadcast %14 : vector<32x1xf32> to vector<32x128xf32>
    %17 = arith.addf %15, %16 : vector<32x128xf32>
    %18 = math.tanh %17 : vector<32x128xf32>
    %c0_15 = arith.constant 0 : index
    %c0_16 = arith.constant 0 : index
    %19 = vector.load %arg8[%c0_15, %c0_16] : memref<8x32xf32, #tpu.memory_space<vmem>>, vector<8x32xf32>
    %c0_17 = arith.constant 0 : index
    %c0_18 = arith.constant 0 : index
    %20 = vector.load %arg9[%c0_17, %c0_18] : memref<8x1xf32, #tpu.memory_space<vmem>>, vector<8x1xf32>
    %cst_19 = arith.constant dense<0.000000e+00> : vector<8x128xf32>
    %21 = tpu.matmul %19, %18, %cst_19 {dimension_numbers = #tpu.dot_dimension_numbers<[1], [0], [0], [1], [0, 0, 1, 1], [], []>} : vector<8x32xf32>, vector<32x128xf32>, vector<8x128xf32> -> vector<8x128xf32>
    %22 = vector.broadcast %20 : vector<8x1xf32> to vector<8x128xf32>
    %23 = arith.addf %21, %22 : vector<8x128xf32>
    %c0_20 = arith.constant 0 : index
    %c0_21 = arith.constant 0 : index
    %24 = vector.load %arg10[%c0_20, %c0_21] : memref<8x128xf32, #tpu.memory_space<vmem>>, vector<8x128xf32>
    tpu.vector_store %arg10[%c0_20, %c0_21], %23 {strides = array<i32>} : memref<8x128xf32, #tpu.memory_space<vmem>>, vector<8x128xf32>,
    return
  }
  func.func @transform_0(%arg0: i32) -> (i32, i32) {
    %c0_i32 = arith.constant 0 : i32
    %c0_i32_0 = arith.constant 0 : i32
    return %arg0, %c0_i32 : i32, i32
  }
  func.func @transform_1(%arg0: i32) -> (i32, i32) {
    %c0_i32 = arith.constant 0 : i32
    %c0_i32_0 = arith.constant 0 : i32
    %c0_i32_1 = arith.constant 0 : i32
    return %c0_i32, %c0_i32_0 : i32, i32
  }
  func.func @transform_2(%arg0: i32) -> (i32, i32) {
    %c0_i32 = arith.constant 0 : i32
    %c0_i32_0 = arith.constant 0 : i32
    %c0_i32_1 = arith.constant 0 : i32
    return %c0_i32, %c0_i32_0 : i32, i32
  }
  func.func @transform_3(%arg0: i32) -> (i32, i32) {
    %c0_i32 = arith.constant 0 : i32
    %c0_i32_0 = arith.constant 0 : i32
    %c0_i32_1 = arith.constant 0 : i32
    return %c0_i32, %c0_i32_0 : i32, i32
  }
  func.func @transform_4(%arg0: i32) -> (i32, i32) {
    %c0_i32 = arith.constant 0 : i32
    %c0_i32_0 = arith.constant 0 : i32
    %c0_i32_1 = arith.constant 0 : i32
    return %c0_i32, %c0_i32_0 : i32, i32
  }
  func.func @transform_5(%arg0: i32) -> (i32, i32) {
    %c0_i32 = arith.constant 0 : i32
    %c0_i32_0 = arith.constant 0 : i32
    %c0_i32_1 = arith.constant 0 : i32
    return %c0_i32, %c0_i32_0 : i32, i32
  }
  func.func @transform_6(%arg0: i32) -> (i32, i32) {
    %c0_i32 = arith.constant 0 : i32
    %c0_i32_0 = arith.constant 0 : i32
    %c0_i32_1 = arith.constant 0 : i32
    return %c0_i32, %c0_i32_0 : i32, i32
  }
  func.func @transform_7(%arg0: i32) -> (i32, i32) {
    %c0_i32 = arith.constant 0 : i32
    %c0_i32_0 = arith.constant 0 : i32
    %c0_i32_1 = arith.constant 0 : i32
    return %c0_i32, %c0_i32_0 : i32, i32
  }
  func.func @transform_8(%arg0: i32) -> (i32, i32) {
    %c0_i32 = arith.constant 0 : i32
    %c0_i32_0 = arith.constant 0 : i32
    %c0_i32_1 = arith.constant 0 : i32
    return %c0_i32, %c0_i32_0 : i32, i32
  }
  func.func @transform_9(%arg0: i32) -> (i32, i32) {
    %c0_i32 = arith.constant 0 : i32
    %c0_i32_0 = arith.constant 0 : i32
    return %c0_i32, %arg0 : i32, i32
  }
}

</mosaic_0001>

<llo_original>
// kernel: tpu_custom_call.1
$region0: #{tpu_custom_call.1}
  #allocation0 [shape = 'u32[]', space=smem, size = 0x4, offset = 0x4, fixed_abs, tag = 'smem constant byte address 0x4 - core index']
  #allocation1 [shape = 'u32[72,128]{1,0:T(1,128)}', space=vmem, size = 0x9000, scoped, tag = 'internal scratch']
  %s0 = inlined_call_operand.vmem [shape: f32[256,16], index: 0, kind: input, shape index: {}]
  %s1 = inlined_call_operand.vmem [shape: f32[32,16], index: 1, kind: input, shape index: {}]
  %s2 = inlined_call_operand.vmem [shape: f32[32,1], index: 2, kind: input, shape index: {}]
  %s3 = inlined_call_operand.vmem [shape: f32[32,32], index: 3, kind: input, shape index: {}]
  %s4 = inlined_call_operand.vmem [shape: f32[32,1], index: 4, kind: input, shape index: {}]
  %s5 = inlined_call_operand.vmem [shape: f32[32,32], index: 5, kind: input, shape index: {}]
  %s6 = inlined_call_operand.vmem [shape: f32[32,1], index: 6, kind: input, shape index: {}]
  %s7 = inlined_call_operand.vmem [shape: f32[8,32], index: 7, kind: input, shape index: {}]
  %s8 = inlined_call_operand.vmem [shape: f32[8,1], index: 8, kind: input, shape index: {}]
  %s9 = inlined_call_operand.hbm [shape: f32[8,256], index: 9, kind: output, shape index: {}]
  %s10 = sld [smem:[#allocation0]]
  $region69: #{tpu_custom_call.1} parent=0
    _
  %s12 = ssub.s32 1, %s10
  %s13 = scalar_select 0, %s12, %s10
  $region1: #{tpu_custom_call.1} parent=0
    #allocation2 [shape = 'u8[8192]{0}', space=vmem, size = 0x2000, scoped, tag = 'output window, operand 0']
    #allocation3 [shape = 's32[2]{0}', space=sflag, size = 0x8, scoped, tag = 'scoped memory for tpu_custom_call.1']
    %14 = vsyncpa [#allocation3], 0
    %s15 = scalar_lea.sflag [#allocation3], 1
    %16 = vsyncpa %s15, 0
    loop: start=0, step=1, limit=4
    $region2: #{tpu_custom_call.1} parent=1 // loop_pre_header
      _
    $region3: #{tpu_custom_call.1} parent=1 // loop_header
      %s18 = sphi 0, %s22
      %p19 = scmp.ge.s32.totalorder %s18, 4
      %s28 = sphi 0, %s30
      %s31 = sphi 0, %s28
      %s32 = sphi 0, %s31
      %s48 = sphi 0, %s32
      %s52 = sphi 0, %s52
      %s54 = sphi 0, %s52
      %s55 = sphi 0, %s54
      %s69 = sphi 0, %s55
      %s73 = sphi 0, %s73
      %s75 = sphi 0, %s73
      %s76 = sphi 0, %s75
      %s90 = sphi 0, %s76
      %s94 = sphi 0, %s94
      %s96 = sphi 0, %s94
      %s97 = sphi 0, %s96
      %s111 = sphi 0, %s97
      %s115 = sphi 0, %s115
      %s117 = sphi 0, %s115
      %s118 = sphi 0, %s117
      %s132 = sphi 0, %s118
      %s136 = sphi 0, %s136
      %s138 = sphi 0, %s136
      %s139 = sphi 0, %s138
      %s153 = sphi 0, %s139
      %s157 = sphi 0, %s157
      %s159 = sphi 0, %s157
      %s160 = sphi 0, %s159
      %s174 = sphi 0, %s160
      %s178 = sphi 0, %s178
      %s180 = sphi 0, %s178
      %s181 = sphi 0, %s180
      %s195 = sphi 0, %s181
      %s199 = sphi 0, %s199
      %s201 = sphi 0, %s199
      %s202 = sphi 0, %s201
      %s216 = sphi 0, %s202
      %s222 = sphi 0, %s224
      %s225 = sphi 0, %s222
      %s226 = sphi 0, %s225
      %s242 = sphi 0, %s226
    $region4: #{tpu_custom_call.1} parent=1 // loop_header_branch
      %21 = sbr.rel (%p19) target = $region8
    $region5: #{tpu_custom_call.1} parent=1 // loop_body
      %s23 = ssub.s32 %s18, 1
      %s24 = ssub.s32 %s18, 2
      %s25 = sadd.s32 %s18, 1
      %s26 = ssub.s32 %s18, %s25
      %p27 = scmp.eq.s32.totalorder %s26, 0
      %s29 = sadd.s32 %s28, 1
      %s30 = scalar_select %p27, %s28, %s29
      %p33 = pneg %p27
      %p34 = scmp.eq.s32.totalorder %s18, 1
      %p35 = por %p33, %p34
      %p36 = scmp.ne.s32.totalorder %s28, %s31
      %p37 = scmp.eq.s32.totalorder %s18, 0
      %p38 = por %p36, %p37
      %p39 = scmp.ne.s32.totalorder %s28, %s31
      %p40 = scmp.eq.s32.totalorder %s23, 1
      %p41 = por %p39, %p40
      %p42 = scmp.ne.s32.totalorder %s31, %s32
      %p43 = scmp.eq.s32.totalorder %s23, 0
      %p44 = por %p42, %p43
      %p45 = scmp.ne.s32.totalorder %s31, %s32
      %p46 = scmp.eq.s32.totalorder %s24, 1
      %p47 = por %p45, %p46
      %p49 = scmp.ne.s32.totalorder %s32, %s48
      %p50 = scmp.eq.s32.totalorder %s24, 0
      %p51 = por %p49, %p50
      %s53 = sadd.s32 %s52, 1
      %p56 = scmp.eq.s32.totalorder %s18, 1
      %p57 = scmp.ne.s32.totalorder %s52, %s54
      %p58 = scmp.eq.s32.totalorder %s18, 0
      %p59 = por %p57, %p58
      %p60 = scmp.ne.s32.totalorder %s52, %s54
      %p61 = scmp.eq.s32.totalorder %s23, 1
      %p62 = por %p60, %p61
      %p63 = scmp.ne.s32.totalorder %s54, %s55
      %p64 = scmp.eq.s32.totalorder %s23, 0
      %p65 = por %p63, %p64
      %p66 = scmp.ne.s32.totalorder %s54, %s55
      %p67 = scmp.eq.s32.totalorder %s24, 1
      %p68 = por %p66, %p67
      %p70 = scmp.ne.s32.totalorder %s55, %s69
      %p71 = scmp.eq.s32.totalorder %s24, 0
      %p72 = por %p70, %p71
      %s74 = sadd.s32 %s73, 1
      %p77 = scmp.eq.s32.totalorder %s18, 1
      %p78 = scmp.ne.s32.totalorder %s73, %s75
      %p79 = scmp.eq.s32.totalorder %s18, 0
      %p80 = por %p78, %p79
      %p81 = scmp.ne.s32.totalorder %s73, %s75
      %p82 = scmp.eq.s32.totalorder %s23, 1
      %p83 = por %p81, %p82
      %p84 = scmp.ne.s32.totalorder %s75, %s76
      %p85 = scmp.eq.s32.totalorder %s23, 0
      %p86 = por %p84, %p85
      %p87 = scmp.ne.s32.totalorder %s75, %s76
      %p88 = scmp.eq.s32.totalorder %s24, 1
      %p89 = por %p87, %p88
      %p91 = scmp.ne.s32.totalorder %s76, %s90
      %p92 = scmp.eq.s32.totalorder %s24, 0
      %p93 = por %p91, %p92
      %s95 = sadd.s32 %s94, 1
      %p98 = scmp.eq.s32.totalorder %s18, 1
      %p99 = scmp.ne.s32.totalorder %s94, %s96
      %p100 = scmp.eq.s32.totalorder %s18, 0
      %p101 = por %p99, %p100
      %p102 = scmp.ne.s32.totalorder %s94, %s96
      %p103 = scmp.eq.s32.totalorder %s23, 1
      %p104 = por %p102, %p103
      %p105 = scmp.ne.s32.totalorder %s96, %s97
      %p106 = scmp.eq.s32.totalorder %s23, 0
      %p107 = por %p105, %p106
      %p108 = scmp.ne.s32.totalorder %s96, %s97
      %p109 = scmp.eq.s32.totalorder %s24, 1
      %p110 = por %p108, %p109
      %p112 = scmp.ne.s32.totalorder %s97, %s111
      %p113 = scmp.eq.s32.totalorder %s24, 0
      %p114 = por %p112, %p113
      %s116 = sadd.s32 %s115, 1
      %p119 = scmp.eq.s32.totalorder %s18, 1
      %p120 = scmp.ne.s32.totalorder %s115, %s117
      %p121 = scmp.eq.s32.totalorder %s18, 0
      %p122 = por %p120, %p121
      %p123 = scmp.ne.s32.totalorder %s115, %s117
      %p124 = scmp.eq.s32.totalorder %s23, 1
      %p125 = por %p123, %p124
      %p126 = scmp.ne.s32.totalorder %s117, %s118
      %p127 = scmp.eq.s32.totalorder %s23, 0
      %p128 = por %p126, %p127
      %p129 = scmp.ne.s32.totalorder %s117, %s118
      %p130 = scmp.eq.s32.totalorder %s24, 1
      %p131 = por %p129, %p130
      %p133 = scmp.ne.s32.totalorder %s118, %s132
      %p134 = scmp.eq.s32.totalorder %s24, 0
      %p135 = por %p133, %p134
      %s137 = sadd.s32 %s136, 1
      %p140 = scmp.eq.s32.totalorder %s18, 1
      %p141 = scmp.ne.s32.totalorder %s136, %s138
      %p142 = scmp.eq.s32.totalorder %s18, 0
      %p143 = por %p141, %p142
      %p144 = scmp.ne.s32.totalorder %s136, %s138
      %p145 = scmp.eq.s32.totalorder %s23, 1
      %p146 = por %p144, %p145
      %p147 = scmp.ne.s32.totalorder %s138, %s139
      %p148 = scmp.eq.s32.totalorder %s23, 0
      %p149 = por %p147, %p148
      %p150 = scmp.ne.s32.totalorder %s138, %s139
      %p151 = scmp.eq.s32.totalorder %s24, 1
      %p152 = por %p150, %p151
      %p154 = scmp.ne.s32.totalorder %s139, %s153
      %p155 = scmp.eq.s32.totalorder %s24, 0
      %p156 = por %p154, %p155
      %s158 = sadd.s32 %s157, 1
      %p161 = scmp.eq.s32.totalorder %s18, 1
      %p162 = scmp.ne.s32.totalorder %s157, %s159
      %p163 = scmp.eq.s32.totalorder %s18, 0
      %p164 = por %p162, %p163
      %p165 = scmp.ne.s32.totalorder %s157, %s159
      %p166 = scmp.eq.s32.totalorder %s23, 1
      %p167 = por %p165, %p166
      %p168 = scmp.ne.s32.totalorder %s159, %s160
      %p169 = scmp.eq.s32.totalorder %s23, 0
      %p170 = por %p168, %p169
      %p171 = scmp.ne.s32.totalorder %s159, %s160
      %p172 = scmp.eq.s32.totalorder %s24, 1
      %p173 = por %p171, %p172
      %p175 = scmp.ne.s32.totalorder %s160, %s174
      %p176 = scmp.eq.s32.totalorder %s24, 0
      %p177 = por %p175, %p176
      %s179 = sadd.s32 %s178, 1
      %p182 = scmp.eq.s32.totalorder %s18, 1
      %p183 = scmp.ne.s32.totalorder %s178, %s180
      %p184 = scmp.eq.s32.totalorder %s18, 0
      %p185 = por %p183, %p184
      %p186 = scmp.ne.s32.totalorder %s178, %s180
      %p187 = scmp.eq.s32.totalorder %s23, 1
      %p188 = por %p186, %p187
      %p189 = scmp.ne.s32.totalorder %s180, %s181
      %p190 = scmp.eq.s32.totalorder %s23, 0
      %p191 = por %p189, %p190
      %p192 = scmp.ne.s32.totalorder %s180, %s181
      %p193 = scmp.eq.s32.totalorder %s24, 1
      %p194 = por %p192, %p193
      %p196 = scmp.ne.s32.totalorder %s181, %s195
      %p197 = scmp.eq.s32.totalorder %s24, 0
      %p198 = por %p196, %p197
      %s200 = sadd.s32 %s199, 1
      %p203 = scmp.eq.s32.totalorder %s18, 1
      %p204 = scmp.ne.s32.totalorder %s199, %s201
      %p205 = scmp.eq.s32.totalorder %s18, 0
      %p206 = por %p204, %p205
      %p207 = scmp.ne.s32.totalorder %s199, %s201
      %p208 = scmp.eq.s32.totalorder %s23, 1
      %p209 = por %p207, %p208
      %p210 = scmp.ne.s32.totalorder %s201, %s202
      %p211 = scmp.eq.s32.totalorder %s23, 0
      %p212 = por %p210, %p211
      %p213 = scmp.ne.s32.totalorder %s201, %s202
      %p214 = scmp.eq.s32.totalorder %s24, 1
      %p215 = por %p213, %p214
      %p217 = scmp.ne.s32.totalorder %s202, %s216
      %p218 = scmp.eq.s32.totalorder %s24, 0
      %p219 = por %p217, %p218
      %s220 = ssub.s32 %s18, %s25
      %p221 = scmp.eq.s32.totalorder %s220, 0
      %s223 = sadd.s32 %s222, 1
      %s224 = scalar_select %p221, %s222, %s223
      %p227 = pneg %p221
      %p228 = scmp.eq.s32.totalorder %s18, 1
      %p229 = por %p227, %p228
      %p230 = scmp.ne.s32.totalorder %s222, %s225
      %p231 = scmp.eq.s32.totalorder %s18, 0
      %p232 = por %p230, %p231
      %p233 = scmp.ne.s32.totalorder %s222, %s225
      %p234 = scmp.eq.s32.totalorder %s23, 1
      %p235 = por %p233, %p234
      %p236 = scmp.ne.s32.totalorder %s225, %s226
      %p237 = scmp.eq.s32.totalorder %s23, 0
      %p238 = por %p236, %p237
      %p239 = scmp.ne.s32.totalorder %s225, %s226
      %p240 = scmp.eq.s32.totalorder %s24, 1
      %p241 = por %p239, %p240
      %p243 = scmp.ne.s32.totalorder %s226, %s242
      %p244 = scmp.eq.s32.totalorder %s24, 0
      %p245 = por %p243, %p244
      %p246 = scmp.le.s32.totalorder 1, %s18
      %p247 = scmp.lt.s32.totalorder %s18, 3
      %p248 = pnand %p246, %p247
      %p249 = pneg %p248
      // Predicated region
      $region9: #{tpu_custom_call.1} parent=5 // pred_check
        _
      $region10: #{tpu_custom_call.1} parent=5 // pred_check_branch
        %251 = sbr.rel (%p248) target = $region12
      $region11: #{tpu_custom_call.1} parent=5 // pred_region
        %s252 = ssub.s32 %s18, 1
        // Predicated region
        $region13: #{tpu_custom_call.1} parent=11 // pred_check
          %p253 = pneg %p65
        $region14: #{tpu_custom_call.1} parent=11 // pred_check_branch
          %255 = sbr.rel (%p253) target = $region16
        $region15: #{tpu_custom_call.1} parent=11 // pred_region
          _
        $region16: #{tpu_custom_call.1} parent=11 // pred_fallthru
          _
        // Predicated region
        $region17: #{tpu_custom_call.1} parent=11 // pred_check
          %p256 = pneg %p86
        $region18: #{tpu_custom_call.1} parent=11 // pred_check_branch
          %258 = sbr.rel (%p256) target = $region20
        $region19: #{tpu_custom_call.1} parent=11 // pred_region
          _
        $region20: #{tpu_custom_call.1} parent=11 // pred_fallthru
          _
        // Predicated region
        $region21: #{tpu_custom_call.1} parent=11 // pred_check
          %p259 = pneg %p107
        $region22: #{tpu_custom_call.1} parent=11 // pred_check_branch
          %261 = sbr.rel (%p259) target = $region24
        $region23: #{tpu_custom_call.1} parent=11 // pred_region
          _
        $region24: #{tpu_custom_call.1} parent=11 // pred_fallthru
          _
        // Predicated region
        $region25: #{tpu_custom_call.1} parent=11 // pred_check
          %p262 = pneg %p128
        $region26: #{tpu_custom_call.1} parent=11 // pred_check_branch
          %264 = sbr.rel (%p262) target = $region28
        $region27: #{tpu_custom_call.1} parent=11 // pred_region
          _
        $region28: #{tpu_custom_call.1} parent=11 // pred_fallthru
          _
        // Predicated region
        $region29: #{tpu_custom_call.1} parent=11 // pred_check
          %p265 = pneg %p149
        $region30: #{tpu_custom_call.1} parent=11 // pred_check_branch
          %267 = sbr.rel (%p265) target = $region32
        $region31: #{tpu_custom_call.1} parent=11 // pred_region
          _
        $region32: #{tpu_custom_call.1} parent=11 // pred_fallthru
          _
        // Predicated region
        $region33: #{tpu_custom_call.1} parent=11 // pred_check
          %p268 = pneg %p170
        $region34: #{tpu_custom_call.1} parent=11 // pred_check_branch
          %270 = sbr.rel (%p268) target = $region36
        $region35: #{tpu_custom_call.1} parent=11 // pred_region
          _
        $region36: #{tpu_custom_call.1} parent=11 // pred_fallthru
          _
        // Predicated region
        $region37: #{tpu_custom_call.1} parent=11 // pred_check
          %p271 = pneg %p191
        $region38: #{tpu_custom_call.1} parent=11 // pred_check_branch
          %273 = sbr.rel (%p271) target = $region40
        $region39: #{tpu_custom_call.1} parent=11 // pred_region
          _
        $region40: #{tpu_custom_call.1} parent=11 // pred_fallthru
          _
        // Predicated region
        $region41: #{tpu_custom_call.1} parent=11 // pred_check
          %p274 = pneg %p212
        $region42: #{tpu_custom_call.1} parent=11 // pred_check_branch
          %276 = sbr.rel (%p274) target = $region44
        $region43: #{tpu_custom_call.1} parent=11 // pred_region
          _
        $region44: #{tpu_custom_call.1} parent=11 // pred_fallthru
          _
      $region12: #{tpu_custom_call.1} parent=5 // pred_fallthru
        _
      %p277 = scmp.lt.s32.totalorder %s18, 2
      // Predicated region
      $region45: #{tpu_custom_call.1} parent=5 // pred_check
        %p278 = pneg %p277
      $region46: #{tpu_custom_call.1} parent=5 // pred_check_branch
        %280 = sbr.rel (%p278) target = $region48
      $region47: #{tpu_custom_call.1} parent=5 // pred_region
        // Predicated region
        $region49: #{tpu_custom_call.1} parent=47 // pred_check
          %p281 = pneg %p38
        $region50: #{tpu_custom_call.1} parent=47 // pred_check_branch
          %283 = sbr.rel (%p281) target = $region52
        $region51: #{tpu_custom_call.1} parent=47 // pred_region
          %s284 = smul.u32 16, %s18
          %p285 = scmp.lt.s32.totalorder %s284, 31
          %s286 = scalar_select %p285, %s284, 31
          %s287 = smul.addr %s286, 8
          %s288 = scalar_lea.vmem %s0, %s287
          %s289 = smul.u32 16, %s18
        $region52: #{tpu_custom_call.1} parent=47 // pred_fallthru
          _
      $region48: #{tpu_custom_call.1} parent=5 // pred_fallthru
        _
      %p290 = scmp.le.s32.totalorder 1, %s18
      %p291 = scmp.lt.s32.totalorder %s18, 3
      %p292 = pnand %p290, %p291
      %p293 = pneg %p292
      // Predicated region
      $region53: #{tpu_custom_call.1} parent=5 // pred_check
        _
      $region54: #{tpu_custom_call.1} parent=5 // pred_check_branch
        %295 = sbr.rel (%p292) target = $region56
      $region55: #{tpu_custom_call.1} parent=5 // pred_region
        %s296 = ssub.s32 %s18, 1
        %s297 = smul.u32 16, %s23
        %p298 = scmp.lt.s32.totalorder %s297, 31
        %s299 = scalar_select %p298, %s297, 31
        %s300 = smul.addr %s299, 8
        %s301 = scalar_lea.vmem %s0, %s300
        %p302 = pneg %p44
        %p303 = pneg %p41
        %p304 = pneg %p65
        %p305 = pneg %p62
        %p306 = pneg %p86
        %p307 = pneg %p83
        %p308 = pneg %p107
        %p309 = pneg %p104
        %p310 = pneg %p128
        %p311 = pneg %p125
        %p312 = pneg %p149
        %p313 = pneg %p146
        %p314 = pneg %p170
        %p315 = pneg %p167
        %p316 = pneg %p191
        %p317 = pneg %p188
        %p318 = pneg %p212
        %p319 = pneg %p209
        %p320 = pneg %p238
        %p321 = pneg %p235
        %s322 = sand.u32 %s225, 1
        %s323 = scalar_lea.sflag [#allocation3], %s322
        %s324 = sand.u32 %s225, 1
        %s325 = smul.addr %s324, 8
        %s326 = scalar_lea.vmem [#allocation2], %s325
        %s327 = smul.u32 16, %s23
        %p328 = scmp.lt.s32.totalorder %s327, 31
        %s329 = scalar_select %p328, %s327, 31
        %s330 = smul.addr %s329, 8
        %s331 = scalar_lea.vmem %s0, %s330
        %s332 = smul.u32 16, %s23
        %v333 = vld [vmem:[%s331] sm:$0xff]
        %v334 = vld [vmem:[%s331 + $0x8] sm:$0xff]
        %v335 = vld [vmem:[%s331 + $0x10] sm:$0xff]
        %v336 = vld [vmem:[%s331 + $0x18] sm:$0xff]
        %v337 = vld [vmem:[%s331 + $0x20] sm:$0xff]
        %v338 = vld [vmem:[%s331 + $0x28] sm:$0xff]
        %v339 = vld [vmem:[%s331 + $0x30] sm:$0xff]
        %v340 = vld [vmem:[%s331 + $0x38] sm:$0xff]
        %v341 = vld [vmem:[%s331 + $0x40] sm:$0xff]
        %v342 = vld [vmem:[%s331 + $0x48] sm:$0xff]
        %v343 = vld [vmem:[%s331 + $0x50] sm:$0xff]
        %v344 = vld [vmem:[%s331 + $0x58] sm:$0xff]
        %v345 = vld [vmem:[%s331 + $0x60] sm:$0xff]
        %v346 = vld [vmem:[%s331 + $0x68] sm:$0xff]
        %v347 = vld [vmem:[%s331 + $0x70] sm:$0xff]
        %v348 = vld [vmem:[%s331 + $0x78] sm:$0xff]
        %v349 = vld [vmem:[%s1] sm:$0xff]
        %v350 = vld [vmem:[%s1 + $0x8] sm:$0xff]
        %v351 = vld [vmem:[%s1 + $0x10] sm:$0xff]
        %v352 = vld [vmem:[%s1 + $0x18] sm:$0xff]
        %v353 = vld [vmem:[%s2] sm:$0xff]
        %v354 = vld [vmem:[%s2 + $0x8] sm:$0xff]
        %v355 = vld [vmem:[%s2 + $0x10] sm:$0xff]
        %v356 = vld [vmem:[%s2 + $0x18] sm:$0xff]
        %358 = vset.pattern.permute.xlu0 0
        %359 = vperm.xlu0 %358, %v353
        %v360 = vpop.permute.xlu0 %359
        %363 = vset.pattern.permute.xlu0 0
        %364 = vperm.xlu0 %363, %v354
        %v365 = vpop.permute.xlu0 %364
        %368 = vset.pattern.permute.xlu0 0
        %369 = vperm.xlu0 %368, %v355
        %v370 = vpop.permute.xlu0 %369
        %373 = vset.pattern.permute.xlu0 0
        %374 = vperm.xlu0 %373, %v356
        %v375 = vpop.permute.xlu0 %374
        %vm377 = vcmask 130048
        %v379 = vsel %vm377, %v349, 0
        %v382 = vsel %vm377, %v350, 0
        %v385 = vsel %vm377, %v351, 0
        %v388 = vsel %vm377, %v352, 0
        %v391 = vsel %vm377, %v333, 0
        %v394 = vsel %vm377, %v334, 0
        %v397 = vsel %vm377, %v335, 0
        %v400 = vsel %vm377, %v336, 0
        %v403 = vsel %vm377, %v337, 0
        %v406 = vsel %vm377, %v338, 0
        %v409 = vsel %vm377, %v339, 0
        %v412 = vsel %vm377, %v340, 0
        %v415 = vsel %vm377, %v341, 0
        %v418 = vsel %vm377, %v342, 0
        %v421 = vsel %vm377, %v343, 0
        %v424 = vsel %vm377, %v344, 0
        %v427 = vsel %vm377, %v345, 0
        %v430 = vsel %vm377, %v346, 0
        %v433 = vsel %vm377, %v347, 0
        %v436 = vsel %vm377, %v348, 0
        %438 = vmatpush.xpose.msra.mxu0 %v436
        %439 = vmatpush.xpose.msra.mxu0 %v433
        %440 = vmatpush.xpose.msra.mxu0 %v430
        %441 = vmatpush.xpose.msra.mxu0 %v427
        %442 = vmatpush.xpose.msra.mxu0 %v424
        %443 = vmatpush.xpose.msra.mxu0 %v421
        %444 = vmatpush.xpose.msra.mxu0 %v418
        %445 = vmatpush.xpose.msra.mxu0 %v415
        %446 = vmatpush.xpose.msra.mxu0 %v412
        %447 = vmatpush.xpose.msra.mxu0 %v409
        %448 = vmatpush.xpose.msra.mxu0 %v406
        %449 = vmatpush.xpose.msra.mxu0 %v403
        %450 = vmatpush.xpose.msra.mxu0 %v400
        %451 = vmatpush.xpose.msra.mxu0 %v397
        %452 = vmatpush.xpose.msra.mxu0 %v394
        %453 = vmatpush.xpose.msra.mxu0 %v391
        %454 = vmatmul.f32.gmra.mxu0 %v379
        %v455 = vpop.f32.mrf.mxu0
        %v456 = vadd.f32 %v360, %v455
        %457 = vmatmul.f32.gmra.mxu0 %v382
        %v458 = vpop.f32.mrf.mxu0
        %v459 = vadd.f32 %v365, %v458
        %460 = vmatmul.f32.gmra.mxu0 %v385
        %v461 = vpop.f32.mrf.mxu0
        %v462 = vadd.f32 %v370, %v461
        %463 = vmatmul.f32.gmra.mxu0 %v388
        %v464 = vpop.f32.mrf.mxu0
        %v465 = vadd.f32 %v375, %v464
        %466 = vdwg.mxu0
        %v467 = vtanh.pop %v456
        %v468 = vtanh.pop %v459
        %v469 = vtanh.pop %v462
        %v470 = vtanh.pop %v465
        %v471 = vld [vmem:[%s3] sm:$0xff]
        %v472 = vld [vmem:[%s3 + $0x8] sm:$0xff]
        %v473 = vld [vmem:[%s3 + $0x10] sm:$0xff]
        %v474 = vld [vmem:[%s3 + $0x18] sm:$0xff]
        %v475 = vld [vmem:[%s4] sm:$0xff]
        %v476 = vld [vmem:[%s4 + $0x8] sm:$0xff]
        %v477 = vld [vmem:[%s4 + $0x10] sm:$0xff]
        %v478 = vld [vmem:[%s4 + $0x18] sm:$0xff]
        %480 = vset.pattern.permute.xlu0 0
        %481 = vperm.xlu0 %480, %v475
        %v482 = vpop.permute.xlu0 %481
        %485 = vset.pattern.permute.xlu0 0
        %486 = vperm.xlu0 %485, %v476
        %v487 = vpop.permute.xlu0 %486
        %490 = vset.pattern.permute.xlu0 0
        %491 = vperm.xlu0 %490, %v477
        %v492 = vpop.permute.xlu0 %491
        %495 = vset.pattern.permute.xlu0 0
        %496 = vperm.xlu0 %495, %v478
        %v497 = vpop.permute.xlu0 %496
        %vm499 = vcmask 261120
        %v501 = vsel %vm499, %v471, 0
        %v504 = vsel %vm499, %v472, 0
        %v507 = vsel %vm499, %v473, 0
        %v510 = vsel %vm499, %v474, 0
        %512 = vmatpush.msra.mxu0 0.0
        %513 = vmatpush.msra.mxu0 0.0
        %514 = vmatpush.msra.mxu0 0.0
        %515 = vmatpush.msra.mxu0 0.0
        %516 = vmatpush.msra.mxu0 0.0
        %517 = vmatpush.msra.mxu0 0.0
        %518 = vmatpush.msra.mxu0 0.0
        %519 = vmatpush.msra.mxu0 0.0
        %520 = vmatpush.msra.mxu0 0.0
        %521 = vmatpush.msra.mxu0 0.0
        %522 = vmatpush.msra.mxu0 0.0
        %523 = vmatpush.msra.mxu0 0.0
        %524 = vmatpush.msra.mxu0 %v470
        %525 = vmatpush.msra.mxu0 %v469
        %526 = vmatpush.msra.mxu0 %v468
        %527 = vmatpush.msra.mxu0 %v467
        %528 = vmatmul.f32.gmra.mxu0 %v501
        %v529 = vpop.f32.mrf.mxu0
        %v530 = vadd.f32 %v482, %v529
        %531 = vmatmul.f32.gmra.mxu0 %v504
        %v532 = vpop.f32.mrf.mxu0
        %v533 = vadd.f32 %v487, %v532
        %534 = vmatmul.f32.gmra.mxu0 %v507
        %v535 = vpop.f32.mrf.mxu0
        %v536 = vadd.f32 %v492, %v535
        %537 = vmatmul.f32.gmra.mxu0 %v510
        %v538 = vpop.f32.mrf.mxu0
        %v539 = vadd.f32 %v497, %v538
        %540 = vdwg.mxu0
        %v541 = vtanh.pop %v530
        %v542 = vtanh.pop %v533
        %v543 = vtanh.pop %v536
        %v544 = vtanh.pop %v539
        %v545 = vld [vmem:[%s5] sm:$0xff]
        %v546 = vld [vmem:[%s5 + $0x8] sm:$0xff]
        %v547 = vld [vmem:[%s5 + $0x10] sm:$0xff]
        %v548 = vld [vmem:[%s5 + $0x18] sm:$0xff]
        %v549 = vld [vmem:[%s6] sm:$0xff]
        %v550 = vld [vmem:[%s6 + $0x8] sm:$0xff]
        %v551 = vld [vmem:[%s6 + $0x10] sm:$0xff]
        %v552 = vld [vmem:[%s6 + $0x18] sm:$0xff]
        %554 = vset.pattern.permute.xlu0 0
        %555 = vperm.xlu0 %554, %v549
        %v556 = vpop.permute.xlu0 %555
        %559 = vset.pattern.permute.xlu0 0
        %560 = vperm.xlu0 %559, %v550
        %v561 = vpop.permute.xlu0 %560
        %564 = vset.pattern.permute.xlu0 0
        %565 = vperm.xlu0 %564, %v551
        %v566 = vpop.permute.xlu0 %565
        %569 = vset.pattern.permute.xlu0 0
        %570 = vperm.xlu0 %569, %v552
        %v571 = vpop.permute.xlu0 %570
        %v574 = vsel %vm499, %v545, 0
        %v577 = vsel %vm499, %v546, 0
        %v580 = vsel %vm499, %v547, 0
        %v583 = vsel %vm499, %v548, 0
        %585 = vmatpush.msra.mxu0 0.0
        %586 = vmatpush.msra.mxu0 0.0
        %587 = vmatpush.msra.mxu0 0.0
        %588 = vmatpush.msra.mxu0 0.0
        %589 = vmatpush.msra.mxu0 0.0
        %590 = vmatpush.msra.mxu0 0.0
        %591 = vmatpush.msra.mxu0 0.0
        %592 = vmatpush.msra.mxu0 0.0
        %593 = vmatpush.msra.mxu0 0.0
        %594 = vmatpush.msra.mxu0 0.0
        %595 = vmatpush.msra.mxu0 0.0
        %596 = vmatpush.msra.mxu0 0.0
        %597 = vmatpush.msra.mxu0 %v544
        %598 = vmatpush.msra.mxu0 %v543
        %599 = vmatpush.msra.mxu0 %v542
        %600 = vmatpush.msra.mxu0 %v541
        %601 = vmatmul.f32.gmra.mxu0 %v574
        %v602 = vpop.f32.mrf.mxu0
        %v603 = vadd.f32 %v556, %v602
        %604 = vmatmul.f32.gmra.mxu0 %v577
        %v605 = vpop.f32.mrf.mxu0
        %v606 = vadd.f32 %v561, %v605
        %607 = vmatmul.f32.gmra.mxu0 %v580
        %v608 = vpop.f32.mrf.mxu0
        %v609 = vadd.f32 %v566, %v608
        %610 = vmatmul.f32.gmra.mxu0 %v583
        %v611 = vpop.f32.mrf.mxu0
        %v612 = vadd.f32 %v571, %v611
        %613 = vdwg.mxu0
        %v614 = vtanh.pop %v603
        %v615 = vtanh.pop %v606
        %v616 = vtanh.pop %v609
        %v617 = vtanh.pop %v612
        %v618 = vld [vmem:[%s7] sm:$0xff]
        %v619 = vld [vmem:[%s8] sm:$0xff]
        %621 = vset.pattern.permute.xlu0 0
        %622 = vperm.xlu0 %621, %v619
        %v623 = vpop.permute.xlu0 %622
        %v626 = vsel %vm499, %v618, 0
        %628 = vmatpush.msra.mxu0 0.0
        %629 = vmatpush.msra.mxu0 0.0
        %630 = vmatpush.msra.mxu0 0.0
        %631 = vmatpush.msra.mxu0 0.0
        %632 = vmatpush.msra.mxu0 0.0
        %633 = vmatpush.msra.mxu0 0.0
        %634 = vmatpush.msra.mxu0 0.0
        %635 = vmatpush.msra.mxu0 0.0
        %636 = vmatpush.msra.mxu0 0.0
        %637 = vmatpush.msra.mxu0 0.0
        %638 = vmatpush.msra.mxu0 0.0
        %639 = vmatpush.msra.mxu0 0.0
        %640 = vmatpush.msra.mxu0 %v617
        %641 = vmatpush.msra.mxu0 %v616
        %642 = vmatpush.msra.mxu0 %v615
        %643 = vmatpush.msra.mxu0 %v614
        %644 = vmatmul.f32.gmra.mxu0 %v626
        %v645 = vpop.f32.mrf.mxu0
        %v646 = vadd.f32 %v623, %v645
        %647 = vdwg.mxu0
        %648 = vst [vmem:[%s326] sm:$0xff] %v646
        %s649 = sand.u32 %s225, 1
        %s650 = scalar_lea.sflag [#allocation3], %s649
        %s651 = sand.u32 %s225, 1
        %s652 = smul.addr %s651, 8
        %s653 = scalar_lea.vmem [#allocation2], %s652
        // Predicated region
        $region57: #{tpu_custom_call.1} parent=55 // pred_check
          %p654 = pneg %p235
        $region58: #{tpu_custom_call.1} parent=55 // pred_check_branch
          %656 = sbr.rel (%p654) target = $region60
        $region59: #{tpu_custom_call.1} parent=55 // pred_region
          %658 = vsyncadd %s650, 0
          %s659 = smul.addr %s23, 8
          %s660 = scalar_lea.hbm %s9, %s659
          %s662 = sshll.u32 %s653, 4
          %s663 = int_to_ptr.vmem [resolvable:$true] %s662
          %s664 = sshll.u32 %s660, 4
          %s665 = int_to_ptr.hbm [resolvable:$true] %s664
          %667 = dma.vmem_to_hbm [thread:$0]  %s663, 128, %s665, %s650
        $region60: #{tpu_custom_call.1} parent=55 // pred_fallthru
          _
      $region56: #{tpu_custom_call.1} parent=5 // pred_fallthru
        _
      %p668 = scmp.le.s32.totalorder 2, %s18
      // Predicated region
      $region61: #{tpu_custom_call.1} parent=5 // pred_check
        %p669 = pneg %p668
      $region62: #{tpu_custom_call.1} parent=5 // pred_check_branch
        %671 = sbr.rel (%p669) target = $region64
      $region63: #{tpu_custom_call.1} parent=5 // pred_region
        %s672 = ssub.s32 %s18, 2
        // Predicated region
        $region65: #{tpu_custom_call.1} parent=63 // pred_check
          %p673 = pneg %p241
        $region66: #{tpu_custom_call.1} parent=63 // pred_check_branch
          %675 = sbr.rel (%p673) target = $region68
        $region67: #{tpu_custom_call.1} parent=63 // pred_region
          %s676 = sand.u32 %s226, 1
          %s677 = scalar_lea.sflag [#allocation3], %s676
          %s678 = sand.u32 %s226, 1
          %s679 = smul.addr %s678, 8
          %s680 = scalar_lea.vmem [#allocation2], %s679
          %682 = dma.done %s677, 128
        $region68: #{tpu_custom_call.1} parent=63 // pred_fallthru
          _
      $region64: #{tpu_custom_call.1} parent=5 // pred_fallthru
        _
    $region6: #{tpu_custom_call.1} parent=1 // loop_footer
      %s22 = sadd.s32 1, %s18
    $region7: #{tpu_custom_call.1} parent=1 // loop_footer_branch
      %17 = sbr.rel target = $region3
    $region8: #{tpu_custom_call.1} parent=1 // loop_exit
      _
    %683 = vsyncpa [#allocation3], 1
    %s684 = scalar_lea.sflag [#allocation3], 1
    %685 = vsyncpa %s684, 1

</llo_original>
